<compile_context>
chip_gen: v7x
topology: tpu7x:2x2x1
jax: 0.10.0
libtpu: 0.0.40
codegen_flags: <defaults>
</compile_context>

<pallas_src>
import functools

import jax
import jax.numpy as jnp
from jax.experimental import pallas as pl
from jax.experimental.pallas import tpu as pltpu

LN_EPS = 1e-5
LANE = 128
SUBLANE = 8


def _round_up(x, m):
    return ((x + m - 1) // m) * m


def _layernorm(x, gamma, beta, true_n, mask):
    """LayerNorm over the last dim (biased variance, PyTorch semantics).

    `true_n` is the un-padded feature width. Padded lanes of `x` are zero by
    construction (zero-padded weights/bias + relu), so the sum for the mean is
    already exact; only the centered term needs the lane mask so that the
    `-mean` in padded lanes does not pollute the variance.
    """
    inv_n = 1.0 / float(true_n)
    mean = jnp.sum(x, axis=-1, keepdims=True) * inv_n
    centered = x - mean
    if mask is not None:
        centered = jnp.where(mask, centered, 0.0)
    var = jnp.sum(centered * centered, axis=-1, keepdims=True) * inv_n
    inv = jax.lax.rsqrt(var + LN_EPS)          # EUP op — effectively free here
    # gamma/beta are zero in padded lanes, so padded output columns stay zero.
    return centered * inv * gamma + beta


def actor_kernel(state_ref,
                 w1_ref, vec1_ref,
                 w2_ref, vec2_ref,
                 w3_ref, b3_ref,
                 out_ref, *, true_hidden):
    w_dtype = w1_ref.dtype
    hid_p = w1_ref.shape[1]

    x = state_ref[...].astype(w_dtype)
    vec1 = vec1_ref[...]                        # rows: [b1, gamma1, beta1]
    vec2 = vec2_ref[...]                        # rows: [b2, gamma2, beta2]

    # Lane mask shared by both LayerNorms (None when hidden is already 128-aligned).
    if true_hidden != hid_p:
        lane = jax.lax.broadcasted_iota(jnp.int32, (1, hid_p), 1)
        mask = lane < true_hidden
    else:
        mask = None

    # fc1 + relu + layernorm1
    h = jnp.dot(x, w1_ref[...], preferred_element_type=jnp.float32)
    h = jnp.maximum(h + vec1[0:1, :], 0.0)
    h = _layernorm(h, vec1[1:2, :], vec1[2:3, :], true_hidden, mask)

    # fc2 + relu + layernorm2
    h = jnp.dot(h.astype(w_dtype), w2_ref[...], preferred_element_type=jnp.float32)
    h = jnp.maximum(h + vec2[0:1, :], 0.0)
    h = _layernorm(h, vec2[1:2, :], vec2[2:3, :], true_hidden, mask)

    # fc3 + tanh
    h = jnp.dot(h.astype(w_dtype), w3_ref[...], preferred_element_type=jnp.float32)
    h = h + b3_ref[...]
    out_ref[...] = jnp.tanh(h).astype(out_ref.dtype)


def actor_forward(state, params, *, tile_b=256):
    """state: [B, obs_dim] f32. params: dict (W stored as [in, out], vectors 1-D)."""
    B, obs_dim = state.shape
    hidden = params["w1"].shape[1]
    action_dim = params["w3"].shape[1]

    # Lane-dense on-device layout.
    obs_p = _round_up(obs_dim, LANE)
    hid_p = _round_up(hidden, LANE)
    act_p = _round_up(action_dim, LANE)

    tile_b = min(tile_b, _round_up(B, SUBLANE))
    b_pad = _round_up(B, tile_b)
    n_tiles = b_pad // tile_b

    f32 = jnp.float32
    wdt = params["w1"].dtype

    # Zero-pad everything (padded gamma/beta/bias = 0 keeps padded lanes dead).
    state_p = jnp.zeros((b_pad, obs_p), f32).at[:B, :obs_dim].set(state.astype(f32))
    w1 = jnp.zeros((obs_p, hid_p), wdt).at[:obs_dim, :hidden].set(params["w1"])
    w2 = jnp.zeros((hid_p, hid_p), wdt).at[:hidden, :hidden].set(params["w2"])
    w3 = jnp.zeros((hid_p, act_p), wdt).at[:hidden, :action_dim].set(params["w3"])
    vec1 = (jnp.zeros((3, hid_p), f32)
            .at[0, :hidden].set(params["b1"].astype(f32))
            .at[1, :hidden].set(params["g1"].astype(f32))
            .at[2, :hidden].set(params["be1"].astype(f32)))
    vec2 = (jnp.zeros((3, hid_p), f32)
            .at[0, :hidden].set(params["b2"].astype(f32))
            .at[1, :hidden].set(params["g2"].astype(f32))
            .at[2, :hidden].set(params["be2"].astype(f32)))
    b3 = jnp.zeros((1, act_p), f32).at[0, :action_dim].set(params["b3"].astype(f32))

    const2 = lambda i: (0, 0)       # weights / vectors stay VMEM-resident
    batch2 = lambda i: (i, 0)       # state / output tiles stream over the grid

    in_specs = [
        pl.BlockSpec((tile_b, obs_p), batch2),
        pl.BlockSpec((obs_p, hid_p), const2),
        pl.BlockSpec((3, hid_p), const2),
        pl.BlockSpec((hid_p, hid_p), const2),
        pl.BlockSpec((3, hid_p), const2),
        pl.BlockSpec((hid_p, act_p), const2),
        pl.BlockSpec((1, act_p), const2),
    ]
    out_specs = pl.BlockSpec((tile_b, act_p), batch2)

    operands = (state_p, w1, vec1, w2, vec2, w3, b3)
    flops = 2 * b_pad * (obs_p * hid_p + hid_p * hid_p + hid_p * act_p)
    transcendentals = b_pad * (2 + act_p)            # 2 rsqrt rows + tanh per elem
    bytes_accessed = sum(int(a.size) * a.dtype.itemsize for a in operands)
    bytes_accessed += b_pad * act_p * 4

    out_p = pl.pallas_call(
        functools.partial(actor_kernel, true_hidden=hidden),
        out_shape=jax.ShapeDtypeStruct((b_pad, act_p), jnp.float32),
        grid_spec=pltpu.PrefetchScalarGridSpec(
            num_scalar_prefetch=0,
            grid=(n_tiles,),
            in_specs=in_specs,
            out_specs=out_specs,
        ),
        compiler_params=pltpu.CompilerParams(
            dimension_semantics=("parallel",),   # lets v7x shard batch tiles across TCs
        ),
        cost_estimate=pl.CostEstimate(
            flops=flops,
            transcendentals=transcendentals,
            bytes_accessed=bytes_accessed,
        ),
    )(*operands)

    return out_p[:B, :action_dim]


def init_params(key, obs_dim, hidden_size, action_dim, weight_dtype=jnp.float32):
    """Deterministic init mimicking nn.Linear default (uniform +/- 1/sqrt(fan_in)).
    Linear weights are stored transposed ([in, out]) for direct x @ W.
    Pass weight_dtype=jnp.bfloat16 to halve weight HBM traffic (dots still acc f32)."""
    ks = jax.random.split(key, 6)

    def linear(kw, kb, fan_in, fan_out):
        bound = 1.0 / (fan_in ** 0.5)
        w = jax.random.uniform(kw, (fan_in, fan_out), jnp.float32, -bound, bound)
        b = jax.random.uniform(kb, (fan_out,), jnp.float32, -bound, bound)
        return w.astype(weight_dtype), b

    w1, b1 = linear(ks[0], ks[1], obs_dim, hidden_size)
    w2, b2 = linear(ks[2], ks[3], hidden_size, hidden_size)
    w3, b3 = linear(ks[4], ks[5], hidden_size, action_dim)

    return {
        "w1": w1, "b1": b1,
        "g1": jnp.ones((hidden_size,), jnp.float32),
        "be1": jnp.zeros((hidden_size,), jnp.float32),
        "w2": w2, "b2": b2,
        "g2": jnp.ones((hidden_size,), jnp.float32),
        "be2": jnp.zeros((hidden_size,), jnp.float32),
        "w3": w3, "b3": b3,
    }


def ref_forward(x, p):
    """Pure-JAX reference of the same math (un-padded)."""
    def ln(v, g, b):
        mean = jnp.mean(v, axis=-1, keepdims=True)
        c = v - mean
        var = jnp.mean(c * c, axis=-1, keepdims=True)
        return c * jax.lax.rsqrt(var + LN_EPS) * g + b

    h = jnp.maximum(x @ p["w1"].astype(jnp.float32) + p["b1"], 0.0)
    h = ln(h, p["g1"], p["be1"])
    h = jnp.maximum(h @ p["w2"].astype(jnp.float32) + p["b2"], 0.0)
    h = ln(h, p["g2"], p["be2"])
    return jnp.tanh(h @ p["w3"].astype(jnp.float32) + p["b3"])


if __name__ == "__main__":
    key = jax.random.PRNGKey(0)
    k_state, k_params = jax.random.split(key)

    batch, obs_dim, hidden_size, action_dim = 2, 16, 32, 8

    state = jax.random.normal(k_state, (batch, obs_dim), jnp.float32)
    params = init_params(k_params, obs_dim, hidden_size, action_dim)

    # jit the whole forward so the host-side padding fuses with the pallas_call.
    fwd = jax.jit(actor_forward)
    out = jax.block_until_ready(fwd(state, params))

    expected = ref_forward(state, params)
    assert out.shape == (batch, action_dim)
    assert jnp.allclose(out, expected, atol=1e-4, rtol=1e-4), \
        float(jnp.max(jnp.abs(out - expected)))

    print("KERNEL_OK")
</pallas_src>

<mosaic_0001>
module attributes {stable_mosaic.version = 11 : i64} {
  func.func @actor_kernel(%arg0: i32, %arg1: memref<8x128xf32, #tpu.memory_space<vmem>>, %arg2: memref<128x128xf32, #tpu.memory_space<vmem>>, %arg3: memref<3x128xf32, #tpu.memory_space<vmem>>, %arg4: memref<128x128xf32, #tpu.memory_space<vmem>>, %arg5: memref<3x128xf32, #tpu.memory_space<vmem>>, %arg6: memref<128x128xf32, #tpu.memory_space<vmem>>, %arg7: memref<1x128xf32, #tpu.memory_space<vmem>>, %arg8: memref<8x128xf32, #tpu.memory_space<vmem>>) attributes {dimension_semantics = [#tpu.dimension_semantics<parallel>], iteration_bounds = array<i64: 1>, scalar_prefetch = 0 : i64, scratch_operands = 0 : i64, tpu.core_type = #tpu.core_type<tc>, window_params = [{transform_indices = @transform_0, window_bounds = array<i64: 8, 128>}, {pipeline_mode = #tpu.pipeline_mode<synchronous>, transform_indices = @transform_1, window_bounds = array<i64: 128, 128>}, {pipeline_mode = #tpu.pipeline_mode<synchronous>, transform_indices = @transform_2, window_bounds = array<i64: 3, 128>}, {pipeline_mode = #tpu.pipeline_mode<synchronous>, transform_indices = @transform_3, window_bounds = array<i64: 128, 128>}, {pipeline_mode = #tpu.pipeline_mode<synchronous>, transform_indices = @transform_4, window_bounds = array<i64: 3, 128>}, {pipeline_mode = #tpu.pipeline_mode<synchronous>, transform_indices = @transform_5, window_bounds = array<i64: 128, 128>}, {pipeline_mode = #tpu.pipeline_mode<synchronous>, transform_indices = @transform_6, window_bounds = array<i64: 1, 128>}, {transform_indices = @transform_7, window_bounds = array<i64: 8, 128>}]} {
    %c0 = arith.constant 0 : index
    %c0_0 = arith.constant 0 : index
    %0 = vector.load %arg1[%c0, %c0_0] : memref<8x128xf32, #tpu.memory_space<vmem>>, vector<8x128xf32>
    %c0_1 = arith.constant 0 : index
    %c0_2 = arith.constant 0 : index
    %1 = vector.load %arg3[%c0_1, %c0_2] : memref<3x128xf32, #tpu.memory_space<vmem>>, vector<3x128xf32>
    %c0_3 = arith.constant 0 : index
    %c0_4 = arith.constant 0 : index
    %2 = vector.load %arg5[%c0_3, %c0_4] : memref<3x128xf32, #tpu.memory_space<vmem>>, vector<3x128xf32>
    %3 = tpu.iota {dimensions = array<i32: 1>} : vector<1x128xi32>
    %c32_i32 = arith.constant 32 : i32
    %4 = vector.broadcast %c32_i32 : i32 to vector<1x128xi32>
    %5 = arith.cmpi slt, %3, %4 : vector<1x128xi32>
    %c0_5 = arith.constant 0 : index
    %c0_6 = arith.constant 0 : index
    %6 = vector.load %arg2[%c0_5, %c0_6] : memref<128x128xf32, #tpu.memory_space<vmem>>, vector<128x128xf32>
    %cst = arith.constant dense<0.000000e+00> : vector<8x128xf32>
    %7 = tpu.matmul %0, %6, %cst {dimension_numbers = #tpu.dot_dimension_numbers<[1], [0], [0], [1], [0, 0, 1, 1], [], []>} : vector<8x128xf32>, vector<128x128xf32>, vector<8x128xf32> -> vector<8x128xf32>
    %8 = vector.extract_strided_slice %1 {offsets = [0, 0], sizes = [1, 128], strides = [1, 1]} : vector<3x128xf32> to vector<1x128xf32>
    %9 = vector.broadcast %8 : vector<1x128xf32> to vector<8x128xf32>
    %10 = arith.addf %7, %9 : vector<8x128xf32>
    %cst_7 = arith.constant 0.000000e+00 : f32
    %11 = vector.broadcast %cst_7 : f32 to vector<8x128xf32>
    %12 = arith.maximumf %10, %11 : vector<8x128xf32>
    %13 = vector.extract_strided_slice %1 {offsets = [1, 0], sizes = [1, 128], strides = [1, 1]} : vector<3x128xf32> to vector<1x128xf32>
    %14 = vector.extract_strided_slice %1 {offsets = [2, 0], sizes = [1, 128], strides = [1, 1]} : vector<3x128xf32> to vector<1x128xf32>
    %cst_8 = arith.constant dense<0.000000e+00> : vector<8xf32>
    %15 = vector.multi_reduction <add>, %12, %cst_8 [1] : vector<8x128xf32> to vector<8xf32>
    %16 = vector.shape_cast %15 : vector<8xf32> to vector<8x1xf32>
    %cst_9 = arith.constant 3.125000e-02 : f32
    %17 = vector.broadcast %cst_9 : f32 to vector<8x1xf32>
    %18 = arith.mulf %16, %17 : vector<8x1xf32>
    %19 = vector.broadcast %18 : vector<8x1xf32> to vector<8x128xf32>
    %20 = arith.subf %12, %19 : vector<8x128xf32>
    %cst_10 = arith.constant 0.000000e+00 : f32
    %21 = vector.shape_cast %5 : vector<1x128xi1> to vector<1x128xi1>
    %22 = vector.broadcast %21 : vector<1x128xi1> to vector<8x128xi1>
    %23 = vector.broadcast %cst_10 : f32 to vector<8x128xf32>
    %24 = arith.select %22, %20, %23 : vector<8x128xi1>, vector<8x128xf32>
    %25 = arith.mulf %24, %24 : vector<8x128xf32>
    %cst_11 = arith.constant dense<0.000000e+00> : vector<8xf32>
    %26 = vector.multi_reduction <add>, %25, %cst_11 [1] : vector<8x128xf32> to vector<8xf32>
    %27 = vector.shape_cast %26 : vector<8xf32> to vector<8x1xf32>
    %cst_12 = arith.constant 3.125000e-02 : f32
    %28 = vector.broadcast %cst_12 : f32 to vector<8x1xf32>
    %29 = arith.mulf %27, %28 : vector<8x1xf32>
    %cst_13 = arith.constant 9.99999974E-6 : f32
    %30 = vector.broadcast %cst_13 : f32 to vector<8x1xf32>
    %31 = arith.addf %29, %30 : vector<8x1xf32>
    %32 = math.rsqrt %31 : vector<8x1xf32>
    %33 = vector.broadcast %32 : vector<8x1xf32> to vector<8x128xf32>
    %34 = arith.mulf %24, %33 : vector<8x128xf32>
    %35 = vector.broadcast %13 : vector<1x128xf32> to vector<8x128xf32>
    %36 = arith.mulf %34, %35 : vector<8x128xf32>
    %37 = vector.broadcast %14 : vector<1x128xf32> to vector<8x128xf32>
    %38 = arith.addf %36, %37 : vector<8x128xf32>
    %c0_14 = arith.constant 0 : index
    %c0_15 = arith.constant 0 : index
    %39 = vector.load %arg4[%c0_14, %c0_15] : memref<128x128xf32, #tpu.memory_space<vmem>>, vector<128x128xf32>
    %cst_16 = arith.constant dense<0.000000e+00> : vector<8x128xf32>
    %40 = tpu.matmul %38, %39, %cst_16 {dimension_numbers = #tpu.dot_dimension_numbers<[1], [0], [0], [1], [0, 0, 1, 1], [], []>} : vector<8x128xf32>, vector<128x128xf32>, vector<8x128xf32> -> vector<8x128xf32>
    %41 = vector.extract_strided_slice %2 {offsets = [0, 0], sizes = [1, 128], strides = [1, 1]} : vector<3x128xf32> to vector<1x128xf32>
    %42 = vector.broadcast %41 : vector<1x128xf32> to vector<8x128xf32>
    %43 = arith.addf %40, %42 : vector<8x128xf32>
    %cst_17 = arith.constant 0.000000e+00 : f32
    %44 = vector.broadcast %cst_17 : f32 to vector<8x128xf32>
    %45 = arith.maximumf %43, %44 : vector<8x128xf32>
    %46 = vector.extract_strided_slice %2 {offsets = [1, 0], sizes = [1, 128], strides = [1, 1]} : vector<3x128xf32> to vector<1x128xf32>
    %47 = vector.extract_strided_slice %2 {offsets = [2, 0], sizes = [1, 128], strides = [1, 1]} : vector<3x128xf32> to vector<1x128xf32>
    %cst_18 = arith.constant dense<0.000000e+00> : vector<8xf32>
    %48 = vector.multi_reduction <add>, %45, %cst_18 [1] : vector<8x128xf32> to vector<8xf32>
    %49 = vector.shape_cast %48 : vector<8xf32> to vector<8x1xf32>
    %cst_19 = arith.constant 3.125000e-02 : f32
    %50 = vector.broadcast %cst_19 : f32 to vector<8x1xf32>
    %51 = arith.mulf %49, %50 : vector<8x1xf32>
    %52 = vector.broadcast %51 : vector<8x1xf32> to vector<8x128xf32>
    %53 = arith.subf %45, %52 : vector<8x128xf32>
    %cst_20 = arith.constant 0.000000e+00 : f32
    %54 = vector.shape_cast %5 : vector<1x128xi1> to vector<1x128xi1>
    %55 = vector.broadcast %54 : vector<1x128xi1> to vector<8x128xi1>
    %56 = vector.broadcast %cst_20 : f32 to vector<8x128xf32>
    %57 = arith.select %55, %53, %56 : vector<8x128xi1>, vector<8x128xf32>
    %58 = arith.mulf %57, %57 : vector<8x128xf32>
    %cst_21 = arith.constant dense<0.000000e+00> : vector<8xf32>
    %59 = vector.multi_reduction <add>, %58, %cst_21 [1] : vector<8x128xf32> to vector<8xf32>
    %60 = vector.shape_cast %59 : vector<8xf32> to vector<8x1xf32>
    %cst_22 = arith.constant 3.125000e-02 : f32
    %61 = vector.broadcast %cst_22 : f32 to vector<8x1xf32>
    %62 = arith.mulf %60, %61 : vector<8x1xf32>
    %cst_23 = arith.constant 9.99999974E-6 : f32
    %63 = vector.broadcast %cst_23 : f32 to vector<8x1xf32>
    %64 = arith.addf %62, %63 : vector<8x1xf32>
    %65 = math.rsqrt %64 : vector<8x1xf32>
    %66 = vector.broadcast %65 : vector<8x1xf32> to vector<8x128xf32>
    %67 = arith.mulf %57, %66 : vector<8x128xf32>
    %68 = vector.broadcast %46 : vector<1x128xf32> to vector<8x128xf32>
    %69 = arith.mulf %67, %68 : vector<8x128xf32>
    %70 = vector.broadcast %47 : vector<1x128xf32> to vector<8x128xf32>
    %71 = arith.addf %69, %70 : vector<8x128xf32>
    %c0_24 = arith.constant 0 : index
    %c0_25 = arith.constant 0 : index
    %72 = vector.load %arg6[%c0_24, %c0_25] : memref<128x128xf32, #tpu.memory_space<vmem>>, vector<128x128xf32>
    %cst_26 = arith.constant dense<0.000000e+00> : vector<8x128xf32>
    %73 = tpu.matmul %71, %72, %cst_26 {dimension_numbers = #tpu.dot_dimension_numbers<[1], [0], [0], [1], [0, 0, 1, 1], [], []>} : vector<8x128xf32>, vector<128x128xf32>, vector<8x128xf32> -> vector<8x128xf32>
    %c0_27 = arith.constant 0 : index
    %c0_28 = arith.constant 0 : index
    %74 = vector.load %arg7[%c0_27, %c0_28] : memref<1x128xf32, #tpu.memory_space<vmem>>, vector<1x128xf32>
    %75 = vector.broadcast %74 : vector<1x128xf32> to vector<8x128xf32>
    %76 = arith.addf %73, %75 : vector<8x128xf32>
    %77 = math.tanh %76 : vector<8x128xf32>
    %c0_29 = arith.constant 0 : index
    %c0_30 = arith.constant 0 : index
    %78 = vector.load %arg8[%c0_29, %c0_30] : memref<8x128xf32, #tpu.memory_space<vmem>>, vector<8x128xf32>
    tpu.vector_store %arg8[%c0_29, %c0_30], %77 {strides = array<i32>} : memref<8x128xf32, #tpu.memory_space<vmem>>, vector<8x128xf32>,
    return
  }
  func.func @transform_0(%arg0: i32) -> (i32, i32) {
    %c0_i32 = arith.constant 0 : i32
    %c0_i32_0 = arith.constant 0 : i32
    return %arg0, %c0_i32 : i32, i32
  }
  func.func @transform_1(%arg0: i32) -> (i32, i32) {
    %c0_i32 = arith.constant 0 : i32
    %c0_i32_0 = arith.constant 0 : i32
    %c0_i32_1 = arith.constant 0 : i32
    return %c0_i32, %c0_i32_0 : i32, i32
  }
  func.func @transform_2(%arg0: i32) -> (i32, i32) {
    %c0_i32 = arith.constant 0 : i32
    %c0_i32_0 = arith.constant 0 : i32
    %c0_i32_1 = arith.constant 0 : i32
    return %c0_i32, %c0_i32_0 : i32, i32
  }
  func.func @transform_3(%arg0: i32) -> (i32, i32) {
    %c0_i32 = arith.constant 0 : i32
    %c0_i32_0 = arith.constant 0 : i32
    %c0_i32_1 = arith.constant 0 : i32
    return %c0_i32, %c0_i32_0 : i32, i32
  }
  func.func @transform_4(%arg0: i32) -> (i32, i32) {
    %c0_i32 = arith.constant 0 : i32
    %c0_i32_0 = arith.constant 0 : i32
    %c0_i32_1 = arith.constant 0 : i32
    return %c0_i32, %c0_i32_0 : i32, i32
  }
  func.func @transform_5(%arg0: i32) -> (i32, i32) {
    %c0_i32 = arith.constant 0 : i32
    %c0_i32_0 = arith.constant 0 : i32
    %c0_i32_1 = arith.constant 0 : i32
    return %c0_i32, %c0_i32_0 : i32, i32
  }
  func.func @transform_6(%arg0: i32) -> (i32, i32) {
    %c0_i32 = arith.constant 0 : i32
    %c0_i32_0 = arith.constant 0 : i32
    %c0_i32_1 = arith.constant 0 : i32
    return %c0_i32, %c0_i32_0 : i32, i32
  }
  func.func @transform_7(%arg0: i32) -> (i32, i32) {
    %c0_i32 = arith.constant 0 : i32
    %c0_i32_0 = arith.constant 0 : i32
    return %arg0, %c0_i32 : i32, i32
  }
}

</mosaic_0001>

<llo_original>
// kernel: actor_forward.1
$region0: #{actor_forward.1}
  #allocation0 [shape = 'u32[]', space=smem, size = 0x4, offset = 0x4, fixed_abs, tag = 'smem constant byte address 0x4 - core index']
  #allocation1 [shape = 'u32[144,128]{1,0:T(1,128)}', space=vmem, size = 0x12000, scoped, tag = 'internal scratch']
  %s0 = inlined_call_operand.vmem [shape: f32[8,128], index: 0, kind: input, shape index: {}]
  %s1 = inlined_call_operand.vmem [shape: f32[128,128], index: 1, kind: input, shape index: {}]
  %s2 = inlined_call_operand.vmem [shape: f32[3,128], index: 2, kind: input, shape index: {}]
  %s3 = inlined_call_operand.vmem [shape: f32[128,128], index: 3, kind: input, shape index: {}]
  %s4 = inlined_call_operand.vmem [shape: f32[3,128], index: 4, kind: input, shape index: {}]
  %s5 = inlined_call_operand.vmem [shape: f32[128,128], index: 5, kind: input, shape index: {}]
  %s6 = inlined_call_operand.vmem [shape: f32[1,128], index: 6, kind: input, shape index: {}]
  %s7 = inlined_call_operand.vmem [shape: f32[8,128], index: 7, kind: output, shape index: {}]
  %s8 = sld [smem:[#allocation0]]
  $region38: #{actor_forward.1} parent=0
    _
  %s10 = ssub.s32 1, %s8
  %s11 = scalar_select 0, %s10, %s8
  // Predicated region
  $region2: #{actor_forward.1} parent=0 // pred_check
    _
  $region3: #{actor_forward.1} parent=0 // pred_check_branch
    %13 = sbr.rel (0) target = $region5
  $region4: #{actor_forward.1} parent=0 // pred_region
    _
  $region5: #{actor_forward.1} parent=0 // pred_fallthru
    _
  // Predicated region
  $region6: #{actor_forward.1} parent=0 // pred_check
    _
  $region7: #{actor_forward.1} parent=0 // pred_check_branch
    %15 = sbr.rel (0) target = $region9
  $region8: #{actor_forward.1} parent=0 // pred_region
    _
  $region9: #{actor_forward.1} parent=0 // pred_fallthru
    _
  // Predicated region
  $region10: #{actor_forward.1} parent=0 // pred_check
    _
  $region11: #{actor_forward.1} parent=0 // pred_check_branch
    %17 = sbr.rel (0) target = $region13
  $region12: #{actor_forward.1} parent=0 // pred_region
    _
  $region13: #{actor_forward.1} parent=0 // pred_fallthru
    _
  // Predicated region
  $region14: #{actor_forward.1} parent=0 // pred_check
    _
  $region15: #{actor_forward.1} parent=0 // pred_check_branch
    %19 = sbr.rel (0) target = $region17
  $region16: #{actor_forward.1} parent=0 // pred_region
    _
  $region17: #{actor_forward.1} parent=0 // pred_fallthru
    _
  // Predicated region
  $region18: #{actor_forward.1} parent=0 // pred_check
    _
  $region19: #{actor_forward.1} parent=0 // pred_check_branch
    %21 = sbr.rel (0) target = $region21
  $region20: #{actor_forward.1} parent=0 // pred_region
    _
  $region21: #{actor_forward.1} parent=0 // pred_fallthru
    _
  // Predicated region
  $region22: #{actor_forward.1} parent=0 // pred_check
    _
  $region23: #{actor_forward.1} parent=0 // pred_check_branch
    %23 = sbr.rel (0) target = $region25
  $region24: #{actor_forward.1} parent=0 // pred_region
    _
  $region25: #{actor_forward.1} parent=0 // pred_fallthru
    _
  // Predicated region
  $region26: #{actor_forward.1} parent=0 // pred_check
    _
  $region27: #{actor_forward.1} parent=0 // pred_check_branch
    %25 = sbr.rel (0) target = $region29
  $region28: #{actor_forward.1} parent=0 // pred_region
    _
  $region29: #{actor_forward.1} parent=0 // pred_fallthru
    _
  %v26 = vld [vmem:[%s0] sm:$0xff]
  %v27 = vld [vmem:[%s2] sm:$0x7]
  %v28 = vld [vmem:[%s4] sm:$0x7]
  %v29 = vlaneseq
  %v30 = vand.u32 %v29, 127
  %vm31 = vcmp.lt.s32.totalorder %v30, 32
  %v32 = vld [vmem:[%s1] sm:$0xff]
  %v33 = vld [vmem:[%s1 + $0x8] sm:$0xff]
  %v34 = vld [vmem:[%s1 + $0x10] sm:$0xff]
  %v35 = vld [vmem:[%s1 + $0x18] sm:$0xff]
  %v36 = vld [vmem:[%s1 + $0x20] sm:$0xff]
  %v37 = vld [vmem:[%s1 + $0x28] sm:$0xff]
  %v38 = vld [vmem:[%s1 + $0x30] sm:$0xff]
  %v39 = vld [vmem:[%s1 + $0x38] sm:$0xff]
  %v40 = vld [vmem:[%s1 + $0x40] sm:$0xff]
  %v41 = vld [vmem:[%s1 + $0x48] sm:$0xff]
  %v42 = vld [vmem:[%s1 + $0x50] sm:$0xff]
  %v43 = vld [vmem:[%s1 + $0x58] sm:$0xff]
  %v44 = vld [vmem:[%s1 + $0x60] sm:$0xff]
  %v45 = vld [vmem:[%s1 + $0x68] sm:$0xff]
  %v46 = vld [vmem:[%s1 + $0x70] sm:$0xff]
  %v47 = vld [vmem:[%s1 + $0x78] sm:$0xff]
  %v48 = vlaneseq
  %v49 = vshrl.u32 %v48, 7
  %v50 = vsub.s32 0, %v49
  %v51 = vrot.slane %v27, %v50
  %52 = vmatprep.subr.mxu0 0.0
  %53 = vmatpush1.msra.mxu0 %v32
  %54 = vmatprep.subr.mxu0 0.0
  %55 = vmatpush1.msra.mxu0 %v33
  %56 = vmatprep.subr.mxu0 0.0
  %57 = vmatpush1.msra.mxu0 %v34
  %58 = vmatprep.subr.mxu0 0.0
  %59 = vmatpush1.msra.mxu0 %v35
  %60 = vmatprep.subr.mxu0 0.0
  %61 = vmatpush1.msra.mxu0 %v36
  %62 = vmatprep.subr.mxu0 0.0
  %63 = vmatpush1.msra.mxu0 %v37
  %64 = vmatprep.subr.mxu0 0.0
  %65 = vmatpush1.msra.mxu0 %v38
  %66 = vmatprep.subr.mxu0 0.0
  %67 = vmatpush1.msra.mxu0 %v39
  %68 = vmatprep.subr.mxu0 0.0
  %69 = vmatpush1.msra.mxu0 %v40
  %70 = vmatprep.subr.mxu0 0.0
  %71 = vmatpush1.msra.mxu0 %v41
  %72 = vmatprep.subr.mxu0 0.0
  %73 = vmatpush1.msra.mxu0 %v42
  %74 = vmatprep.subr.mxu0 0.0
  %75 = vmatpush1.msra.mxu0 %v43
  %76 = vmatprep.subr.mxu0 0.0
  %77 = vmatpush1.msra.mxu0 %v44
  %78 = vmatprep.subr.mxu0 0.0
  %79 = vmatpush1.msra.mxu0 %v45
  %80 = vmatprep.subr.mxu0 0.0
  %81 = vmatpush1.msra.mxu0 %v46
  %82 = vmatprep.subr.mxu0 0.0
  %83 = vmatpush1.msra.mxu0 %v47
  %84 = vmatprep.subr.mxu0 0.0
  %85 = vmatpush1.msra.mxu0 0.0
  %86 = vmatprep.subr.mxu0 0.0
  %87 = vmatpush1.msra.mxu0 0.0
  %88 = vmatprep.subr.mxu0 0.0
  %89 = vmatpush1.msra.mxu0 0.0
  %90 = vmatprep.subr.mxu0 0.0
  %91 = vmatpush1.msra.mxu0 0.0
  %92 = vmatprep.subr.mxu0 0.0
  %93 = vmatpush1.msra.mxu0 0.0
  %94 = vmatprep.subr.mxu0 0.0
  %95 = vmatpush1.msra.mxu0 0.0
  %96 = vmatprep.subr.mxu0 0.0
  %97 = vmatpush1.msra.mxu0 0.0
  %98 = vmatprep.subr.mxu0 0.0
  %99 = vmatpush1.msra.mxu0 0.0
  %100 = vmatprep.subr.mxu0 0.0
  %101 = vmatpush1.msra.mxu0 0.0
  %102 = vmatprep.subr.mxu0 0.0
  %103 = vmatpush1.msra.mxu0 0.0
  %104 = vmatprep.subr.mxu0 0.0
  %105 = vmatpush1.msra.mxu0 0.0
  %106 = vmatprep.subr.mxu0 0.0
  %107 = vmatpush1.msra.mxu0 0.0
  %108 = vmatprep.subr.mxu0 0.0
  %109 = vmatpush1.msra.mxu0 0.0
  %110 = vmatprep.subr.mxu0 0.0
  %111 = vmatpush1.msra.mxu0 0.0
  %112 = vmatprep.subr.mxu0 0.0
  %113 = vmatpush1.msra.mxu0 0.0
  %114 = vmatprep.subr.mxu0 0.0
  %115 = vmatpush1.msra.mxu0 0.0
  %116 = vmatprep.mubr.f32.mxu0 0.0
  %117 = vmatmul.mubr.f32.gmra.mrb[0].mxu0 %v26
  %v118 = vpop.f32.mrb[0].mxu0
  %v119 = vadd.f32 %v51, %v118
  %v120 = vpop.f32.mrb[0].mxu0
  %121 = vdwg.mxu0
  %v122 = vmax.f32 %v119, 0.0
  %123 = vadd.xlane.f32.xlu0 %v122
  %v124 = vpop.xlane.xlu0 %123
  %v125 = vmul.f32 %v124, 0.03125
  %v126 = vsub.f32 %v122, %v125
  %v127 = vsel %vm31, 1, 0
  %vm128 = vcmp.eq.s32.totalorder %v127, 1
  %v129 = vsel %vm128, %v126, 0.0
  %v130 = vmul.f32 %v129, %v129
  %131 = vadd.xlane.f32.xlu0 %v130
  %v132 = vpop.xlane.xlu0 %131
  %v133 = vmul.f32 %v132, 0.03125
  %v134 = vadd.f32 %v133, 1e-05
  %v135 = vrsqrt.pop %v134
  %v136 = vmul.f32 %v129, %v135
  %v137 = vlaneseq
  %v138 = vshrl.u32 %v137, 7
  %v139 = vsub.s32 1, %v138
  %v140 = vrot.slane %v27, %v139
  %v141 = vmul.f32 %v136, %v140
  %v142 = vlaneseq
  %v143 = vshrl.u32 %v142, 7
  %v144 = vsub.s32 2, %v143
  %v145 = vrot.slane %v27, %v144
  %v146 = vadd.f32 %v141, %v145
  %v147 = vld [vmem:[%s3] sm:$0xff]
  %v148 = vld [vmem:[%s3 + $0x8] sm:$0xff]
  %v149 = vld [vmem:[%s3 + $0x10] sm:$0xff]
  %v150 = vld [vmem:[%s3 + $0x18] sm:$0xff]
  %v151 = vld [vmem:[%s3 + $0x20] sm:$0xff]
  %v152 = vld [vmem:[%s3 + $0x28] sm:$0xff]
  %v153 = vld [vmem:[%s3 + $0x30] sm:$0xff]
  %v154 = vld [vmem:[%s3 + $0x38] sm:$0xff]
  %v155 = vld [vmem:[%s3 + $0x40] sm:$0xff]
  %v156 = vld [vmem:[%s3 + $0x48] sm:$0xff]
  %v157 = vld [vmem:[%s3 + $0x50] sm:$0xff]
  %v158 = vld [vmem:[%s3 + $0x58] sm:$0xff]
  %v159 = vld [vmem:[%s3 + $0x60] sm:$0xff]
  %v160 = vld [vmem:[%s3 + $0x68] sm:$0xff]
  %v161 = vld [vmem:[%s3 + $0x70] sm:$0xff]
  %v162 = vld [vmem:[%s3 + $0x78] sm:$0xff]
  %v163 = vlaneseq
  %v164 = vshrl.u32 %v163, 7
  %v165 = vsub.s32 0, %v164
  %v166 = vrot.slane %v28, %v165
  %167 = vmatprep.subr.mxu0 0.0
  %168 = vmatpush1.msra.mxu0 %v147
  %169 = vmatprep.subr.mxu0 0.0
  %170 = vmatpush1.msra.mxu0 %v148
  %171 = vmatprep.subr.mxu0 0.0
  %172 = vmatpush1.msra.mxu0 %v149
  %173 = vmatprep.subr.mxu0 0.0
  %174 = vmatpush1.msra.mxu0 %v150
  %175 = vmatprep.subr.mxu0 0.0
  %176 = vmatpush1.msra.mxu0 %v151
  %177 = vmatprep.subr.mxu0 0.0
  %178 = vmatpush1.msra.mxu0 %v152
  %179 = vmatprep.subr.mxu0 0.0
  %180 = vmatpush1.msra.mxu0 %v153
  %181 = vmatprep.subr.mxu0 0.0
  %182 = vmatpush1.msra.mxu0 %v154
  %183 = vmatprep.subr.mxu0 0.0
  %184 = vmatpush1.msra.mxu0 %v155
  %185 = vmatprep.subr.mxu0 0.0
  %186 = vmatpush1.msra.mxu0 %v156
  %187 = vmatprep.subr.mxu0 0.0
  %188 = vmatpush1.msra.mxu0 %v157
  %189 = vmatprep.subr.mxu0 0.0
  %190 = vmatpush1.msra.mxu0 %v158
  %191 = vmatprep.subr.mxu0 0.0
  %192 = vmatpush1.msra.mxu0 %v159
  %193 = vmatprep.subr.mxu0 0.0
  %194 = vmatpush1.msra.mxu0 %v160
  %195 = vmatprep.subr.mxu0 0.0
  %196 = vmatpush1.msra.mxu0 %v161
  %197 = vmatprep.subr.mxu0 0.0
  %198 = vmatpush1.msra.mxu0 %v162
  %199 = vmatprep.subr.mxu0 0.0
  %200 = vmatpush1.msra.mxu0 0.0
  %201 = vmatprep.subr.mxu0 0.0
  %202 = vmatpush1.msra.mxu0 0.0
  %203 = vmatprep.subr.mxu0 0.0
  %204 = vmatpush1.msra.mxu0 0.0
  %205 = vmatprep.subr.mxu0 0.0
  %206 = vmatpush1.msra.mxu0 0.0
  %207 = vmatprep.subr.mxu0 0.0
  %208 = vmatpush1.msra.mxu0 0.0
  %209 = vmatprep.subr.mxu0 0.0
  %210 = vmatpush1.msra.mxu0 0.0
  %211 = vmatprep.subr.mxu0 0.0
  %212 = vmatpush1.msra.mxu0 0.0
  %213 = vmatprep.subr.mxu0 0.0
  %214 = vmatpush1.msra.mxu0 0.0
  %215 = vmatprep.subr.mxu0 0.0
  %216 = vmatpush1.msra.mxu0 0.0
  %217 = vmatprep.subr.mxu0 0.0
  %218 = vmatpush1.msra.mxu0 0.0
  %219 = vmatprep.subr.mxu0 0.0
  %220 = vmatpush1.msra.mxu0 0.0
  %221 = vmatprep.subr.mxu0 0.0
  %222 = vmatpush1.msra.mxu0 0.0
  %223 = vmatprep.subr.mxu0 0.0
  %224 = vmatpush1.msra.mxu0 0.0
  %225 = vmatprep.subr.mxu0 0.0
  %226 = vmatpush1.msra.mxu0 0.0
  %227 = vmatprep.subr.mxu0 0.0
  %228 = vmatpush1.msra.mxu0 0.0
  %229 = vmatprep.subr.mxu0 0.0
  %230 = vmatpush1.msra.mxu0 0.0
  %231 = vmatprep.mubr.f32.mxu0 0.0
  %232 = vmatmul.mubr.f32.gmra.mrb[0].mxu0 %v146
  %v233 = vpop.f32.mrb[0].mxu0
  %v234 = vadd.f32 %v166, %v233
  %v235 = vpop.f32.mrb[0].mxu0
  %236 = vdwg.mxu0
  %v237 = vmax.f32 %v234, 0.0
  %238 = vadd.xlane.f32.xlu0 %v237
  %v239 = vpop.xlane.xlu0 %238
  %v240 = vmul.f32 %v239, 0.03125
  %v241 = vsub.f32 %v237, %v240
  %v242 = vsel %vm128, %v241, 0.0
  %v243 = vmul.f32 %v242, %v242
  %244 = vadd.xlane.f32.xlu0 %v243
  %v245 = vpop.xlane.xlu0 %244
  %v246 = vmul.f32 %v245, 0.03125
  %v247 = vadd.f32 %v246, 1e-05
  %v248 = vrsqrt.pop %v247
  %v249 = vmul.f32 %v242, %v248
  %v250 = vlaneseq
  %v251 = vshrl.u32 %v250, 7
  %v252 = vsub.s32 1, %v251
  %v253 = vrot.slane %v28, %v252
  %v254 = vmul.f32 %v249, %v253
  %v255 = vlaneseq
  %v256 = vshrl.u32 %v255, 7
  %v257 = vsub.s32 2, %v256
  %v258 = vrot.slane %v28, %v257
  %v259 = vadd.f32 %v254, %v258
  %v260 = vld [vmem:[%s5] sm:$0xff]
  %v261 = vld [vmem:[%s5 + $0x8] sm:$0xff]
  %v262 = vld [vmem:[%s5 + $0x10] sm:$0xff]
  %v263 = vld [vmem:[%s5 + $0x18] sm:$0xff]
  %v264 = vld [vmem:[%s5 + $0x20] sm:$0xff]
  %v265 = vld [vmem:[%s5 + $0x28] sm:$0xff]
  %v266 = vld [vmem:[%s5 + $0x30] sm:$0xff]
  %v267 = vld [vmem:[%s5 + $0x38] sm:$0xff]
  %v268 = vld [vmem:[%s5 + $0x40] sm:$0xff]
  %v269 = vld [vmem:[%s5 + $0x48] sm:$0xff]
  %v270 = vld [vmem:[%s5 + $0x50] sm:$0xff]
  %v271 = vld [vmem:[%s5 + $0x58] sm:$0xff]
  %v272 = vld [vmem:[%s5 + $0x60] sm:$0xff]
  %v273 = vld [vmem:[%s5 + $0x68] sm:$0xff]
  %v274 = vld [vmem:[%s5 + $0x70] sm:$0xff]
  %v275 = vld [vmem:[%s5 + $0x78] sm:$0xff]
  %v276 = vld [vmem:[%s6] sm:$0x1]
  %v278 = vlaneseq
  %v279 = vshrl.u32 %v278, 7
  %v280 = vsub.s32 0, %v279
  %v281 = vrot.slane %v276, %v280
  %283 = vmatprep.subr.mxu0 0.0
  %284 = vmatpush1.msra.mxu0 %v260
  %285 = vmatprep.subr.mxu0 0.0
  %286 = vmatpush1.msra.mxu0 %v261
  %287 = vmatprep.subr.mxu0 0.0
  %288 = vmatpush1.msra.mxu0 %v262
  %289 = vmatprep.subr.mxu0 0.0
  %290 = vmatpush1.msra.mxu0 %v263
  %291 = vmatprep.subr.mxu0 0.0
  %292 = vmatpush1.msra.mxu0 %v264
  %293 = vmatprep.subr.mxu0 0.0
  %294 = vmatpush1.msra.mxu0 %v265
  %295 = vmatprep.subr.mxu0 0.0
  %296 = vmatpush1.msra.mxu0 %v266
  %297 = vmatprep.subr.mxu0 0.0
  %298 = vmatpush1.msra.mxu0 %v267
  %299 = vmatprep.subr.mxu0 0.0
  %300 = vmatpush1.msra.mxu0 %v268
  %301 = vmatprep.subr.mxu0 0.0
  %302 = vmatpush1.msra.mxu0 %v269
  %303 = vmatprep.subr.mxu0 0.0
  %304 = vmatpush1.msra.mxu0 %v270
  %305 = vmatprep.subr.mxu0 0.0
  %306 = vmatpush1.msra.mxu0 %v271
  %307 = vmatprep.subr.mxu0 0.0
  %308 = vmatpush1.msra.mxu0 %v272
  %309 = vmatprep.subr.mxu0 0.0
  %310 = vmatpush1.msra.mxu0 %v273
  %311 = vmatprep.subr.mxu0 0.0
  %312 = vmatpush1.msra.mxu0 %v274
  %313 = vmatprep.subr.mxu0 0.0
  %314 = vmatpush1.msra.mxu0 %v275
  %315 = vmatprep.subr.mxu0 0.0
  %316 = vmatpush1.msra.mxu0 0.0
  %317 = vmatprep.subr.mxu0 0.0
  %318 = vmatpush1.msra.mxu0 0.0
  %319 = vmatprep.subr.mxu0 0.0
  %320 = vmatpush1.msra.mxu0 0.0
  %321 = vmatprep.subr.mxu0 0.0
  %322 = vmatpush1.msra.mxu0 0.0
  %323 = vmatprep.subr.mxu0 0.0
  %324 = vmatpush1.msra.mxu0 0.0
  %325 = vmatprep.subr.mxu0 0.0
  %326 = vmatpush1.msra.mxu0 0.0
  %327 = vmatprep.subr.mxu0 0.0
  %328 = vmatpush1.msra.mxu0 0.0
  %329 = vmatprep.subr.mxu0 0.0
  %330 = vmatpush1.msra.mxu0 0.0
  %331 = vmatprep.subr.mxu0 0.0
  %332 = vmatpush1.msra.mxu0 0.0
  %333 = vmatprep.subr.mxu0 0.0
  %334 = vmatpush1.msra.mxu0 0.0
  %335 = vmatprep.subr.mxu0 0.0
  %336 = vmatpush1.msra.mxu0 0.0
  %337 = vmatprep.subr.mxu0 0.0
  %338 = vmatpush1.msra.mxu0 0.0
  %339 = vmatprep.subr.mxu0 0.0
  %340 = vmatpush1.msra.mxu0 0.0
  %341 = vmatprep.subr.mxu0 0.0
  %342 = vmatpush1.msra.mxu0 0.0
  %343 = vmatprep.subr.mxu0 0.0
  %344 = vmatpush1.msra.mxu0 0.0
  %345 = vmatprep.subr.mxu0 0.0
  %346 = vmatpush1.msra.mxu0 0.0
  %347 = vmatprep.mubr.f32.mxu0 0.0
  %348 = vmatmul.mubr.f32.gmra.mrb[0].mxu0 %v259
  %v349 = vpop.f32.mrb[0].mxu0
  %v350 = vadd.f32 %v281, %v349
  %v351 = vpop.f32.mrb[0].mxu0
  %352 = vdwg.mxu0
  %v353 = vtanh.pop %v350
  %354 = vst [vmem:[%s7] sm:$0xff] %v353
  // Predicated region
  $region30: #{actor_forward.1} parent=0 // pred_check
    _
  $region31: #{actor_forward.1} parent=0 // pred_check_branch
    %356 = sbr.rel (0) target = $region33
  $region32: #{actor_forward.1} parent=0 // pred_region
    _
  $region33: #{actor_forward.1} parent=0 // pred_fallthru
    _
  // Predicated region
  $region34: #{actor_forward.1} parent=0 // pred_check
    _
  $region35: #{actor_forward.1} parent=0 // pred_check_branch
    %358 = sbr.rel (0) target = $region37
  $region36: #{actor_forward.1} parent=0 // pred_region
    _
  $region37: #{actor_forward.1} parent=0 // pred_fallthru
    _

</llo_original>
